<compile_context>
chip_gen: v5e
topology: v5e:2x2
jax: 0.10.0
libtpu: 0.0.40
codegen_flags: <defaults>
</compile_context>

<pallas_src>
import jax
import jax.numpy as jnp
from jax.experimental import pallas as pl
from jax.experimental.pallas import tpu as pltpu

NORMALIZATION_FACTOR = 0.596
NORMINV = 1.0 / NORMALIZATION_FACTOR

_LANES = 128          # minimum lane-dense slab width
_MIB = 1024 * 1024


def _mp_silu_kernel(x_ref, o_ref):
    # f32 compute everywhere (v5e VPU/EUP have no bf16; DMA is the binding
    # slot on all chips so the upcast is free).
    xf = x_ref[...].astype(jnp.float32)
    o_ref[...] = (xf * jax.nn.sigmoid(xf) * jnp.float32(NORMINV)).astype(o_ref.dtype)


def _sublane_align(dtype):
    # Sub-32-bit dtypes pack along sublanes: row tiles must be a multiple of
    # 8 (32-bit), 16 (bf16/f16), 32 (int8/fp8).
    return max(8, 32 // jnp.dtype(dtype).itemsize)


def _select_block_bytes():
    """Per-generation block sizing (HBM-bound => biggest block that amortizes
    the ~0.35 us/step grid overhead while leaving scoped-VMEM headroom).

    v7x (64 MiB physical VMEM, 3.2 TB/s HBM): 4 MiB blocks -> 2 operands x 2
    pipeline buffers = 16 MiB, per-step overhead <10% of DMA time.
    v5e/v6e (128 MiB physical VMEM): 6 MiB blocks, scoped limit raised to
    48 MiB so the larger blocks are safe on v5e's 16 MiB default too.
    """
    block_bytes, vmem_limit = 4 * _MIB, 40 * _MIB
    try:
        vmem_cap = getattr(pltpu.get_tpu_info(), "vmem_capacity_bytes", None)
        if vmem_cap is not None and vmem_cap > 96 * _MIB:
            block_bytes, vmem_limit = 6 * _MIB, 48 * _MIB
    except Exception:
        pass
    return block_bytes, vmem_limit


def _pick_lanes(n):
    # Widest lane-dense slab width that divides n exactly (never pads).
    for lanes in (1024, 512, 256, _LANES):
        if n % lanes == 0:
            return lanes
    return None


def _pallas_silu_2d(slab, tile_rows, grid, semantics, vmem_limit):
    rows, lanes = slab.shape
    n = rows * lanes
    itemsize = jnp.dtype(slab.dtype).itemsize
    return pl.pallas_call(
        _mp_silu_kernel,
        out_shape=jax.ShapeDtypeStruct((rows, lanes), slab.dtype),
        grid=grid,
        in_specs=[pl.BlockSpec((tile_rows, lanes), lambda i: (i, 0))],
        out_specs=pl.BlockSpec((tile_rows, lanes), lambda i: (i, 0)),
        compiler_params=pltpu.CompilerParams(
            dimension_semantics=semantics,
            vmem_limit_bytes=int(vmem_limit),
        ),
        # Advertise the true (memory-dominated) cost so XLA schedules and
        # overlaps surrounding ops correctly.
        cost_estimate=pl.CostEstimate(
            flops=5 * n, transcendentals=n, bytes_accessed=2 * n * itemsize
        ),
    )(slab)


def _run_silu_2d(slab, block_bytes, vmem_limit):
    rows, lanes = slab.shape
    itemsize = jnp.dtype(slab.dtype).itemsize
    align = _sublane_align(slab.dtype)

    cap = (block_bytes // (lanes * itemsize)) // align * align
    cap = max(cap, align)

    if rows <= cap:
        # Single block equal to the full array extent (always a legal block).
        tile_rows, grid = rows, (1,)
    else:
        # Large aligned tile; ragged row tail handled by a masked last block
        # (stale VMEM rows never land in HBM: output writes are masked).
        tile_rows, grid = cap, (pl.cdiv(rows, cap),)

    # CORE_PARALLEL shards the row-block axis across both TensorCores on v7x
    # (the biggest lever there for a purely HBM-bound kernel); harmless no-op
    # on single-TC chips.  Fall back to "arbitrary" if unsupported.
    core_parallel = getattr(pltpu, "CORE_PARALLEL", None)
    if core_parallel is not None:
        try:
            return _pallas_silu_2d(slab, tile_rows, grid, (core_parallel,), vmem_limit)
        except Exception:
            pass
    return _pallas_silu_2d(slab, tile_rows, grid, ("arbitrary",), vmem_limit)


def magnitude_preserving_silu(x, *, block_bytes=None):
    """Elementwise magnitude-preserving SiLU via a Pallas TPU kernel.

    Semantics match the PyTorch module: (1/0.596) * torch.nn.SiLU()(x).
    """
    orig_shape, orig_dtype = x.shape, x.dtype
    n = x.size
    if n == 0:
        return x

    auto_block, vmem_limit = _select_block_bytes()
    if block_bytes is None:
        block_bytes = auto_block

    flat = x.reshape(-1)
    n_body = (n // _LANES) * _LANES   # 128-aligned prefix

    if n_body == n:
        # Fast path (typical NCHW conv activations): metadata-only reshape,
        # no padding, no output slicing -> exactly 1 HBM read + 1 HBM write.
        lanes = _pick_lanes(n)
        out = _run_silu_2d(flat.reshape(n // lanes, lanes), block_bytes, vmem_limit)
        return out.reshape(orig_shape)

    # Ragged path: 128-aligned prefix through the kernel, <128-element tail in
    # plain jnp.  No full-tensor pad + output-slice HBM round trips.
    parts = []
    if n_body > 0:
        lanes = _pick_lanes(n_body)
        body = _run_silu_2d(
            flat[:n_body].reshape(n_body // lanes, lanes), block_bytes, vmem_limit
        ).reshape(-1)
        parts.append(body)
    tail = flat[n_body:].astype(jnp.float32)
    parts.append((tail * jax.nn.sigmoid(tail) * jnp.float32(NORMINV)).astype(orig_dtype))
    return jnp.concatenate(parts).reshape(orig_shape)


def _ref(x):
    xf = x.astype(jnp.float32)
    return (jnp.float32(NORMINV) * (xf * jax.nn.sigmoid(xf))).astype(x.dtype)


if __name__ == "__main__":
    key = jax.random.PRNGKey(0)
    k1, k2, k3, k4 = jax.random.split(key, 4)

    # Primary: NCHW input, consistent with post-conv activations.
    x1 = jax.random.normal(k1, (2, 4, 16, 16), dtype=jnp.float32)
    y1 = magnitude_preserving_silu(x1)
    jax.block_until_ready(y1)
    assert y1.shape == x1.shape and y1.dtype == x1.dtype
    assert jnp.allclose(y1, _ref(x1), atol=1e-5, rtol=1e-5)

    # Ragged element count (n % 128 != 0): aligned body + jnp tail.
    x2 = jax.random.normal(k2, (2, 3, 47), dtype=jnp.float32)
    y2 = magnitude_preserving_silu(x2)
    assert jnp.allclose(y2, _ref(x2), atol=1e-5, rtol=1e-5)

    # Multi-block grid with a masked (overhanging) last block: tiny forced
    # block size so rows % tile_rows != 0 and rows is not a multiple of 8.
    x3 = jax.random.normal(k3, (1, 3, 136, 128), dtype=jnp.float32)
    y3 = magnitude_preserving_silu(x3, block_bytes=64 * 1024)
    assert jnp.allclose(y3, _ref(x3), atol=1e-5, rtol=1e-5)

    # bf16 input (kernel computes in f32, stores bf16).
    x4 = jax.random.normal(k4, (2, 4, 16, 16), dtype=jnp.bfloat16)
    y4 = magnitude_preserving_silu(x4)
    assert y4.dtype == jnp.bfloat16
    assert jnp.allclose(
        y4.astype(jnp.float32), _ref(x4).astype(jnp.float32), atol=2e-2, rtol=2e-2
    )

    print("KERNEL_OK")
</pallas_src>

<mosaic_0001>
module attributes {stable_mosaic.version = 11 : i64} {
  func.func @_mp_silu_kernel(%arg0: i32, %arg1: memref<2x1024xf32, #tpu.memory_space<vmem>>, %arg2: memref<2x1024xf32, #tpu.memory_space<vmem>>) attributes {dimension_semantics = [#tpu.dimension_semantics<core_parallel>], iteration_bounds = array<i64: 1>, scalar_prefetch = 0 : i64, scratch_operands = 0 : i64, tpu.core_type = #tpu.core_type<tc>, window_params = [{transform_indices = @transform_0, window_bounds = array<i64: 2, 1024>}, {transform_indices = @transform_1, window_bounds = array<i64: 2, 1024>}]} {
    %c0 = arith.constant 0 : index
    %c0_0 = arith.constant 0 : index
    %0 = vector.load %arg1[%c0, %c0_0] : memref<2x1024xf32, #tpu.memory_space<vmem>>, vector<2x1024xf32>
    %1 = arith.negf %0 : vector<2x1024xf32>
    %2 = math.exp %1 : vector<2x1024xf32>
    %cst = arith.constant 1.000000e+00 : f32
    %3 = vector.broadcast %cst : f32 to vector<2x1024xf32>
    %4 = arith.addf %3, %2 : vector<2x1024xf32>
    %5 = arith.divf %3, %4 : vector<2x1024xf32>
    %6 = arith.mulf %0, %5 : vector<2x1024xf32>
    %cst_1 = arith.constant 1.67785239 : f32
    %7 = vector.broadcast %cst_1 : f32 to vector<2x1024xf32>
    %8 = arith.mulf %6, %7 : vector<2x1024xf32>
    %c0_2 = arith.constant 0 : index
    %c0_3 = arith.constant 0 : index
    %9 = vector.load %arg2[%c0_2, %c0_3] : memref<2x1024xf32, #tpu.memory_space<vmem>>, vector<2x1024xf32>
    tpu.vector_store %arg2[%c0_2, %c0_3], %8 {strides = array<i32>} : memref<2x1024xf32, #tpu.memory_space<vmem>>, vector<2x1024xf32>,
    return
  }
  func.func @transform_0(%arg0: i32) -> (i32, i32) {
    %c0_i32 = arith.constant 0 : i32
    %c0_i32_0 = arith.constant 0 : i32
    return %arg0, %c0_i32 : i32, i32
  }
  func.func @transform_1(%arg0: i32) -> (i32, i32) {
    %c0_i32 = arith.constant 0 : i32
    %c0_i32_0 = arith.constant 0 : i32
    return %arg0, %c0_i32 : i32, i32
  }
}

module attributes {stable_mosaic.version = 11 : i64} {
  func.func @_mp_silu_kernel(%arg0: i32, %arg1: memref<2x1024xf32, #tpu.memory_space<vmem>>, %arg2: memref<2x1024xf32, #tpu.memory_space<vmem>>) attributes {dimension_semantics = [#tpu.dimension_semantics<arbitrary>], iteration_bounds = array<i64: 1>, scalar_prefetch = 0 : i64, scratch_operands = 0 : i64, tpu.core_type = #tpu.core_type<tc>, window_params = [{transform_indices = @transform_0, window_bounds = array<i64: 2, 1024>}, {transform_indices = @transform_1, window_bounds = array<i64: 2, 1024>}]} {
    %c0 = arith.constant 0 : index
    %c0_0 = arith.constant 0 : index
    %0 = vector.load %arg1[%c0, %c0_0] : memref<2x1024xf32, #tpu.memory_space<vmem>>, vector<2x1024xf32>
    %1 = arith.negf %0 : vector<2x1024xf32>
    %2 = math.exp %1 : vector<2x1024xf32>
    %cst = arith.constant 1.000000e+00 : f32
    %3 = vector.broadcast %cst : f32 to vector<2x1024xf32>
    %4 = arith.addf %3, %2 : vector<2x1024xf32>
    %5 = arith.divf %3, %4 : vector<2x1024xf32>
    %6 = arith.mulf %0, %5 : vector<2x1024xf32>
    %cst_1 = arith.constant 1.67785239 : f32
    %7 = vector.broadcast %cst_1 : f32 to vector<2x1024xf32>
    %8 = arith.mulf %6, %7 : vector<2x1024xf32>
    %c0_2 = arith.constant 0 : index
    %c0_3 = arith.constant 0 : index
    %9 = vector.load %arg2[%c0_2, %c0_3] : memref<2x1024xf32, #tpu.memory_space<vmem>>, vector<2x1024xf32>
    tpu.vector_store %arg2[%c0_2, %c0_3], %8 {strides = array<i32>} : memref<2x1024xf32, #tpu.memory_space<vmem>>, vector<2x1024xf32>,
    return
  }
  func.func @transform_0(%arg0: i32) -> (i32, i32) {
    %c0_i32 = arith.constant 0 : i32
    %c0_i32_0 = arith.constant 0 : i32
    return %arg0, %c0_i32 : i32, i32
  }
  func.func @transform_1(%arg0: i32) -> (i32, i32) {
    %c0_i32 = arith.constant 0 : i32
    %c0_i32_0 = arith.constant 0 : i32
    return %arg0, %c0_i32 : i32, i32
  }
}

</mosaic_0001>

<llo_original>
// kernel: tpu_custom_call.1
$region0: #{tpu_custom_call.1}
  #allocation0 [shape = 'u32[]', space=smem, size = 0x4, offset = 0x4, fixed_abs, tag = 'smem constant byte address 0x4 - core index']
  #allocation1 [shape = 'u32[72,128]{1,0:T(1,128)}', space=vmem, size = 0x9000, scoped, tag = 'internal scratch']
  %s0 = inlined_call_operand.hbm [shape: f32[2,1024], index: 0, kind: input, shape index: {}]
  %s1 = inlined_call_operand.hbm [shape: f32[2,1024], index: 1, kind: output, shape index: {}]
  %s2 = sld [smem:[#allocation0]]
  $region18: #{tpu_custom_call.1} parent=0
    _
  %s4 = ssub.s32 1, %s2
  %s5 = scalar_select 0, %s4, %s2
  $region1: #{tpu_custom_call.1} parent=0
    #allocation2 [shape = 'u8[8192]{0}', space=vmem, size = 0x2000, scoped, tag = 'input window, operand 0, single buffered']
    #allocation3 [shape = 's32[1]{0}', space=sflag, size = 0x4, scoped, tag = 'scoped memory for tpu_custom_call.1']
    #allocation4 [shape = 's32[1]{0}', space=sflag, size = 0x4, scoped, tag = 'scoped memory for tpu_custom_call.1']
    #allocation5 [shape = 'u8[8192]{0}', space=vmem, size = 0x2000, scoped, tag = 'output window, operand 0, single buffered']
    %6 = vsyncpa [#allocation3], 0
    %7 = vsyncpa [#allocation4], 0
    // Predicated region
    $region2: #{tpu_custom_call.1} parent=1 // pred_check
      _
    $region3: #{tpu_custom_call.1} parent=1 // pred_check_branch
      %9 = sbr.rel (0) target = $region5
    $region4: #{tpu_custom_call.1} parent=1 // pred_region
      %11 = vsyncadd [#allocation3], 0
      %s12 = smul.addr %s5, 8
      %s13 = smul.addr %s12, 2
      %s14 = scalar_lea.hbm %s0, %s13
      %s16 = sshll.u32 %s14, 4
      %s17 = int_to_ptr.hbm [resolvable:$true] %s16
      %s18 = sshll.u32 [#allocation2], 4
      %s19 = int_to_ptr.vmem [resolvable:$true] %s18
      %21 = dma.hbm_to_vmem [thread:$0]  %s17, 256, %s19, [#allocation3]
    $region5: #{tpu_custom_call.1} parent=1 // pred_fallthru
      _
    // Predicated region
    $region6: #{tpu_custom_call.1} parent=1 // pred_check
      _
    $region7: #{tpu_custom_call.1} parent=1 // pred_check_branch
      %23 = sbr.rel (0) target = $region9
    $region8: #{tpu_custom_call.1} parent=1 // pred_region
      %25 = dma.done [#allocation3], 256
    $region9: #{tpu_custom_call.1} parent=1 // pred_fallthru
      _
    %v26 = vld [vmem:[#allocation2] sm:$0xff]
    %v27 = vld [vmem:[#allocation2 + $0x8] sm:$0xff]
    %v28 = vxor.u32 %v26, 2147483648
    %v29 = vxor.u32 %v27, 2147483648
    %v30 = vmul.f32 %v28, 1.442695
    %v31 = vpow.pop %v30
    %v32 = vmul.f32 %v29, 1.442695
    %v33 = vpow.pop %v32
    %v34 = vadd.f32 %v31, 1.0
    %v35 = vadd.f32 %v33, 1.0
    %v36 = vrcp.pop %v34
    %v37 = vmul.f32 %v34, %v36
    %v38 = vsub.f32 1.0, %v37
    %v39 = vmul.f32 %v36, %v38
    %v40 = vadd.f32 %v36, %v39
    %vm41 = vweird.f32 %v34
    %vm42 = vweird.f32 %v36
    %vm43 = vmor %vm41, %vm42
    %v44 = vsel %vm43, %v36, %v40
    %v45 = vand.u32 2147483647, %v34
    %vm46 = vcmp.eq.f32.partialorder %v45, 8.507059e+37
    %v47 = vand.u32 %v34, 2147483648
    %v48 = vor.u32 1.1754944e-38, %v47
    %v49 = vsel %vm46, %v48, %v44
    %v50 = vmul.f32 1.0, %v49
    %v51 = vrcp.pop %v35
    %v52 = vmul.f32 %v35, %v51
    %v53 = vsub.f32 1.0, %v52
    %v54 = vmul.f32 %v51, %v53
    %v55 = vadd.f32 %v51, %v54
    %vm56 = vweird.f32 %v35
    %vm57 = vweird.f32 %v51
    %vm58 = vmor %vm56, %vm57
    %v59 = vsel %vm58, %v51, %v55
    %v60 = vand.u32 2147483647, %v35
    %vm61 = vcmp.eq.f32.partialorder %v60, 8.507059e+37
    %v62 = vand.u32 %v35, 2147483648
    %v63 = vor.u32 1.1754944e-38, %v62
    %v64 = vsel %vm61, %v63, %v59
    %v65 = vmul.f32 1.0, %v64
    %v66 = vmul.f32 %v26, %v50
    %v67 = vmul.f32 %v27, %v65
    %v68 = vmul.f32 %v66, 1.6778524
    %v69 = vmul.f32 %v67, 1.6778524
    %70 = vst [vmem:[#allocation5] sm:$0xff] %v68
    %71 = vst [vmem:[#allocation5 + $0x8] sm:$0xff] %v69
    // Predicated region
    $region10: #{tpu_custom_call.1} parent=1 // pred_check
      _
    $region11: #{tpu_custom_call.1} parent=1 // pred_check_branch
      %73 = sbr.rel (0) target = $region13
    $region12: #{tpu_custom_call.1} parent=1 // pred_region
      %75 = vsyncadd [#allocation4], 0
      %s76 = smul.addr %s5, 8
      %s77 = smul.addr %s76, 2
      %s78 = scalar_lea.hbm %s1, %s77
      %s80 = sshll.u32 [#allocation5], 4
      %s81 = int_to_ptr.vmem [resolvable:$true] %s80
      %s82 = sshll.u32 %s78, 4
      %s83 = int_to_ptr.hbm [resolvable:$true] %s82
      %85 = dma.vmem_to_hbm [thread:$0]  %s81, 256, %s83, [#allocation4]
    $region13: #{tpu_custom_call.1} parent=1 // pred_fallthru
      _
    // Predicated region
    $region14: #{tpu_custom_call.1} parent=1 // pred_check
      _
    $region15: #{tpu_custom_call.1} parent=1 // pred_check_branch
      %87 = sbr.rel (0) target = $region17
    $region16: #{tpu_custom_call.1} parent=1 // pred_region
      %89 = dma.done [#allocation4], 256
    $region17: #{tpu_custom_call.1} parent=1 // pred_fallthru
      _
    %90 = vsyncpa [#allocation3], 1
    %91 = vsyncpa [#allocation4], 1

// kernel: tpu_custom_call.1
$region0: #{tpu_custom_call.1}
  #allocation0 [shape = 'u32[]', space=smem, size = 0x4, offset = 0x4, fixed_abs, tag = 'smem constant byte address 0x4 - core index']
  #allocation1 [shape = 'u32[72,128]{1,0:T(1,128)}', space=vmem, size = 0x9000, scoped, tag = 'internal scratch']
  %s0 = inlined_call_operand.hbm [shape: f32[2,1024], index: 0, kind: input, shape index: {}]
  %s1 = inlined_call_operand.hbm [shape: f32[2,1024], index: 1, kind: output, shape index: {}]
  %s2 = sld [smem:[#allocation0]]
  $region18: #{tpu_custom_call.1} parent=0
    _
  %s4 = ssub.s32 1, %s2
  %s5 = scalar_select 0, %s4, %s2
  $region1: #{tpu_custom_call.1} parent=0
    #allocation2 [shape = 'u8[8192]{0}', space=vmem, size = 0x2000, scoped, tag = 'input window, operand 0, single buffered']
    #allocation3 [shape = 's32[1]{0}', space=sflag, size = 0x4, scoped, tag = 'scoped memory for tpu_custom_call.1']
    #allocation4 [shape = 's32[1]{0}', space=sflag, size = 0x4, scoped, tag = 'scoped memory for tpu_custom_call.1']
    #allocation5 [shape = 'u8[8192]{0}', space=vmem, size = 0x2000, scoped, tag = 'output window, operand 0, single buffered']
    %6 = vsyncpa [#allocation3], 0
    %7 = vsyncpa [#allocation4], 0
    // Predicated region
    $region2: #{tpu_custom_call.1} parent=1 // pred_check
      _
    $region3: #{tpu_custom_call.1} parent=1 // pred_check_branch
      %9 = sbr.rel (0) target = $region5
    $region4: #{tpu_custom_call.1} parent=1 // pred_region
      %11 = vsyncadd [#allocation3], 0
      %s13 = sshll.u32 %s0, 4
      %s14 = int_to_ptr.hbm [resolvable:$true] %s13
      %s15 = sshll.u32 [#allocation2], 4
      %s16 = int_to_ptr.vmem [resolvable:$true] %s15
      %18 = dma.hbm_to_vmem [thread:$0]  %s14, 256, %s16, [#allocation3]
    $region5: #{tpu_custom_call.1} parent=1 // pred_fallthru
      _
    // Predicated region
    $region6: #{tpu_custom_call.1} parent=1 // pred_check
      _
    $region7: #{tpu_custom_call.1} parent=1 // pred_check_branch
      %20 = sbr.rel (0) target = $region9
    $region8: #{tpu_custom_call.1} parent=1 // pred_region
      %22 = dma.done [#allocation3], 256
    $region9: #{tpu_custom_call.1} parent=1 // pred_fallthru
      _
    %v23 = vld [vmem:[#allocation2] sm:$0xff]
    %v24 = vld [vmem:[#allocation2 + $0x8] sm:$0xff]
    %v25 = vxor.u32 %v23, 2147483648
    %v26 = vxor.u32 %v24, 2147483648
    %v27 = vmul.f32 %v25, 1.442695
    %v28 = vpow.pop %v27
    %v29 = vmul.f32 %v26, 1.442695
    %v30 = vpow.pop %v29
    %v31 = vadd.f32 %v28, 1.0
    %v32 = vadd.f32 %v30, 1.0
    %v33 = vrcp.pop %v31
    %v34 = vmul.f32 %v31, %v33
    %v35 = vsub.f32 1.0, %v34
    %v36 = vmul.f32 %v33, %v35
    %v37 = vadd.f32 %v33, %v36
    %vm38 = vweird.f32 %v31
    %vm39 = vweird.f32 %v33
    %vm40 = vmor %vm38, %vm39
    %v41 = vsel %vm40, %v33, %v37
    %v42 = vand.u32 2147483647, %v31
    %vm43 = vcmp.eq.f32.partialorder %v42, 8.507059e+37
    %v44 = vand.u32 %v31, 2147483648
    %v45 = vor.u32 1.1754944e-38, %v44
    %v46 = vsel %vm43, %v45, %v41
    %v47 = vmul.f32 1.0, %v46
    %v48 = vrcp.pop %v32
    %v49 = vmul.f32 %v32, %v48
    %v50 = vsub.f32 1.0, %v49
    %v51 = vmul.f32 %v48, %v50
    %v52 = vadd.f32 %v48, %v51
    %vm53 = vweird.f32 %v32
    %vm54 = vweird.f32 %v48
    %vm55 = vmor %vm53, %vm54
    %v56 = vsel %vm55, %v48, %v52
    %v57 = vand.u32 2147483647, %v32
    %vm58 = vcmp.eq.f32.partialorder %v57, 8.507059e+37
    %v59 = vand.u32 %v32, 2147483648
    %v60 = vor.u32 1.1754944e-38, %v59
    %v61 = vsel %vm58, %v60, %v56
    %v62 = vmul.f32 1.0, %v61
    %v63 = vmul.f32 %v23, %v47
    %v64 = vmul.f32 %v24, %v62
    %v65 = vmul.f32 %v63, 1.6778524
    %v66 = vmul.f32 %v64, 1.6778524
    %67 = vst [vmem:[#allocation5] sm:$0xff] %v65
    %68 = vst [vmem:[#allocation5 + $0x8] sm:$0xff] %v66
    // Predicated region
    $region10: #{tpu_custom_call.1} parent=1 // pred_check
      _
    $region11: #{tpu_custom_call.1} parent=1 // pred_check_branch
      %70 = sbr.rel (0) target = $region13
    $region12: #{tpu_custom_call.1} parent=1 // pred_region
      %72 = vsyncadd [#allocation4], 0
      %s74 = sshll.u32 [#allocation5], 4
      %s75 = int_to_ptr.vmem [resolvable:$true] %s74
      %s76 = sshll.u32 %s1, 4
      %s77 = int_to_ptr.hbm [resolvable:$true] %s76
      %79 = dma.vmem_to_hbm [thread:$0]  %s75, 256, %s77, [#allocation4]
    $region13: #{tpu_custom_call.1} parent=1 // pred_fallthru
      _
    // Predicated region
    $region14: #{tpu_custom_call.1} parent=1 // pred_check
      _
    $region15: #{tpu_custom_call.1} parent=1 // pred_check_branch
      %81 = sbr.rel (0) target = $region17
    $region16: #{tpu_custom_call.1} parent=1 // pred_region
      %83 = dma.done [#allocation4], 256
    $region17: #{tpu_custom_call.1} parent=1 // pred_fallthru
      _
    %84 = vsyncpa [#allocation3], 1
    %85 = vsyncpa [#allocation4], 1

</llo_original>
